<compile_context>
chip_gen: v7x
topology: tpu7x:2x2x1
jax: 0.10.0
libtpu: 0.0.40
codegen_flags: <defaults>
</compile_context>

<pallas_src>
import jax
import jax.numpy as jnp
from jax.experimental import pallas as pl
from jax.experimental.pallas import tpu as pltpu

REPEATS = 3  # cat((x, x, x), dim=0)


def _resident_rhs_kernel(lhs_ref, rhs_ref, out_ref):
    # lhs_ref: (1, tm, N) row panel; rhs_ref: (1, N, N) resident; out_ref: (3, tm, N)
    y = jnp.dot(lhs_ref[0], rhs_ref[0], preferred_element_type=jnp.float32)
    y = jnp.maximum(y, 0.0).astype(out_ref.dtype)   # relu on VPU
    out_ref[0] = y                                   # three cheap VMEM stores
    out_ref[1] = y
    out_ref[2] = y


def _tiled_kernel(lhs_ref, rhs_ref, out_ref):
    # lhs_ref: (1, tm, tk), rhs_ref: (1, tk, tn), out_ref: (3, tm, tn) f32,
    # resident across the K grid axis -> accumulate directly into out_ref[0].
    k = pl.program_id(2)

    @pl.when(k == 0)
    def _():
        out_ref[0] = jnp.zeros_like(out_ref[0])

    out_ref[0] += jnp.dot(lhs_ref[0], rhs_ref[0],
                          preferred_element_type=jnp.float32)

    @pl.when(k == pl.num_programs(2) - 1)
    def _():
        y = jnp.maximum(out_ref[0], 0.0)
        out_ref[0] = y
        out_ref[1] = y
        out_ref[2] = y


def _pick_row_tile(N):
    # Row-panel size: multiple of 8, divides N, and gives >= 2 grid steps so
    # both v7x TensorCores get work (harmless no-op on single-TC v5e/v6e).
    for cand in (256, 128, 64, 32, 16, 8):
        if N % cand == 0 and N // cand >= 2:
            return cand
    return N


def cat_matmul_relu(x, *, max_resident_n=1024, tile=None, use_bf16=False):
    """x: (1, N, N) f32 -> (3, N, N) f32 == relu(cat((x,x,x),0) @ x)."""
    B, N, N2 = x.shape
    assert B == 1 and N == N2, "torch.matmul broadcast only valid for B == 1, square"
    assert N % 128 == 0, "N must be a multiple of 128 for lane-dense tiles"

    operand = x.astype(jnp.bfloat16) if use_bf16 else x
    out_dtype = jnp.float32

    if N <= max_resident_n:
        # Resident-RHS path: RHS fetched once and kept in VMEM; LHS/output row
        # panels stream through, pipelining the 3x output writeback behind MXU.
        tm = _pick_row_tile(N)
        return pl.pallas_call(
            _resident_rhs_kernel,
            out_shape=jax.ShapeDtypeStruct((REPEATS, N, N), out_dtype),
            grid=(N // tm,),
            in_specs=[
                pl.BlockSpec((1, tm, N), lambda i: (0, i, 0)),   # LHS row panel
                pl.BlockSpec((1, N, N), lambda i: (0, 0, 0)),    # RHS resident
            ],
            out_specs=pl.BlockSpec((REPEATS, tm, N), lambda i: (0, i, 0)),
            compiler_params=pltpu.CompilerParams(
                dimension_semantics=("parallel",),
                vmem_limit_bytes=48 << 20,   # safe headroom on v7x's 64 MiB
            ),
        )(operand, operand)

    # Large-N path: M/N/K tiling, accumulating directly in the f32 output
    # block (no scratch).  tile=512 is the safe default for v7x; on v5e/v6e
    # (128 MiB VMEM) tile=1024 can be passed for less operand re-read traffic.
    if tile is None:
        tile = max(d for d in (512, 256, 128) if N % d == 0)
    tm = tn = tk = tile
    grid = (N // tm, N // tn, N // tk)

    return pl.pallas_call(
        _tiled_kernel,
        out_shape=jax.ShapeDtypeStruct((REPEATS, N, N), out_dtype),
        grid=grid,
        in_specs=[
            # LHS window (i, k) and RHS window (k, j) differ, so the same
            # HBM array is legitimately bound twice here.
            pl.BlockSpec((1, tm, tk), lambda i, j, k: (0, i, k)),
            pl.BlockSpec((1, tk, tn), lambda i, j, k: (0, k, j)),
        ],
        out_specs=pl.BlockSpec((REPEATS, tm, tn), lambda i, j, k: (0, i, j)),
        compiler_params=pltpu.CompilerParams(
            dimension_semantics=("parallel", "parallel", "arbitrary"),
            vmem_limit_bytes=48 << 20,
        ),
    )(operand, operand)


def reference(x):
    cat = jnp.concatenate([x, x, x], axis=0)          # (3, N, N)
    y = jnp.einsum("bij,jk->bik", cat, x[0])          # broadcast single RHS batch
    return jnp.maximum(y, 0.0)


if __name__ == "__main__":
    key = jax.random.PRNGKey(0)

    # Small shape consistent with the module's forward (B=1, square matmul).
    N = 128
    x = jax.random.normal(key, (1, N, N), dtype=jnp.float32)
    out = jax.block_until_ready(cat_matmul_relu(x))
    assert out.shape == (REPEATS, N, N), out.shape
    assert jnp.allclose(out, reference(x), atol=1e-4, rtol=1e-4), "resident-RHS mismatch"

    # Also exercise the tiled (large-N) code path cheaply by forcing it.
    N2 = 256
    x2 = jax.random.normal(jax.random.PRNGKey(1), (1, N2, N2), dtype=jnp.float32)
    out2 = jax.block_until_ready(cat_matmul_relu(x2, max_resident_n=0, tile=128))
    assert out2.shape == (REPEATS, N2, N2), out2.shape
    assert jnp.allclose(out2, reference(x2), atol=1e-4, rtol=1e-4), "tiled mismatch"

    print("KERNEL_OK")
</pallas_src>

<mosaic_0001>
module attributes {stable_mosaic.version = 11 : i64} {
  func.func @_resident_rhs_kernel(%arg0: i32, %arg1: memref<1x64x128xf32, #tpu.memory_space<vmem>>, %arg2: memref<1x128x128xf32, #tpu.memory_space<vmem>>, %arg3: memref<3x64x128xf32, #tpu.memory_space<vmem>>) attributes {dimension_semantics = [#tpu.dimension_semantics<parallel>], iteration_bounds = array<i64: 2>, scalar_prefetch = 0 : i64, scratch_operands = 0 : i64, tpu.core_type = #tpu.core_type<tc>, window_params = [{transform_indices = @transform_0, window_bounds = array<i64: 1, 64, 128>}, {pipeline_mode = #tpu.pipeline_mode<synchronous>, transform_indices = @transform_1, window_bounds = array<i64: 1, 128, 128>}, {transform_indices = @transform_2, window_bounds = array<i64: 3, 64, 128>}]} {
    %c0 = arith.constant 0 : index
    %c0_0 = arith.constant 0 : index
    %c0_1 = arith.constant 0 : index
    %0 = vector.load %arg1[%c0, %c0_0, %c0_1] : memref<1x64x128xf32, #tpu.memory_space<vmem>>, vector<1x64x128xf32>
    %1 = vector.shape_cast %0 : vector<1x64x128xf32> to vector<64x128xf32>
    %c0_2 = arith.constant 0 : index
    %c0_3 = arith.constant 0 : index
    %c0_4 = arith.constant 0 : index
    %2 = vector.load %arg2[%c0_2, %c0_3, %c0_4] : memref<1x128x128xf32, #tpu.memory_space<vmem>>, vector<1x128x128xf32>
    %3 = vector.shape_cast %2 : vector<1x128x128xf32> to vector<128x128xf32>
    %cst = arith.constant dense<0.000000e+00> : vector<64x128xf32>
    %4 = tpu.matmul %1, %3, %cst {dimension_numbers = #tpu.dot_dimension_numbers<[1], [0], [0], [1], [0, 0, 1, 1], [], []>} : vector<64x128xf32>, vector<128x128xf32>, vector<64x128xf32> -> vector<64x128xf32>
    %cst_5 = arith.constant 0.000000e+00 : f32
    %5 = vector.broadcast %cst_5 : f32 to vector<64x128xf32>
    %6 = arith.maximumf %4, %5 : vector<64x128xf32>
    %c0_6 = arith.constant 0 : index
    %c0_7 = arith.constant 0 : index
    %c0_8 = arith.constant 0 : index
    %7 = vector.load %arg3[%c0_6, %c0_7, %c0_8] : memref<3x64x128xf32, #tpu.memory_space<vmem>>, vector<1x64x128xf32>
    %8 = vector.shape_cast %7 : vector<1x64x128xf32> to vector<64x128xf32>
    %9 = vector.shape_cast %6 : vector<64x128xf32> to vector<1x64x128xf32>
    tpu.vector_store %arg3[%c0_6, %c0_7, %c0_8], %9 {strides = array<i32>} : memref<3x64x128xf32, #tpu.memory_space<vmem>>, vector<1x64x128xf32>,
    %c1 = arith.constant 1 : index
    %c0_9 = arith.constant 0 : index
    %c0_10 = arith.constant 0 : index
    %10 = vector.load %arg3[%c1, %c0_9, %c0_10] : memref<3x64x128xf32, #tpu.memory_space<vmem>>, vector<1x64x128xf32>
    %11 = vector.shape_cast %10 : vector<1x64x128xf32> to vector<64x128xf32>
    %12 = vector.shape_cast %6 : vector<64x128xf32> to vector<1x64x128xf32>
    tpu.vector_store %arg3[%c1, %c0_9, %c0_10], %12 {strides = array<i32>} : memref<3x64x128xf32, #tpu.memory_space<vmem>>, vector<1x64x128xf32>,
    %c2 = arith.constant 2 : index
    %c0_11 = arith.constant 0 : index
    %c0_12 = arith.constant 0 : index
    %13 = vector.load %arg3[%c2, %c0_11, %c0_12] : memref<3x64x128xf32, #tpu.memory_space<vmem>>, vector<1x64x128xf32>
    %14 = vector.shape_cast %13 : vector<1x64x128xf32> to vector<64x128xf32>
    %15 = vector.shape_cast %6 : vector<64x128xf32> to vector<1x64x128xf32>
    tpu.vector_store %arg3[%c2, %c0_11, %c0_12], %15 {strides = array<i32>} : memref<3x64x128xf32, #tpu.memory_space<vmem>>, vector<1x64x128xf32>,
    return
  }
  func.func @transform_0(%arg0: i32) -> (i32, i32, i32) {
    %c0_i32 = arith.constant 0 : i32
    %c0_i32_0 = arith.constant 0 : i32
    %c0_i32_1 = arith.constant 0 : i32
    return %c0_i32, %arg0, %c0_i32_0 : i32, i32, i32
  }
  func.func @transform_1(%arg0: i32) -> (i32, i32, i32) {
    %c0_i32 = arith.constant 0 : i32
    %c0_i32_0 = arith.constant 0 : i32
    %c0_i32_1 = arith.constant 0 : i32
    %c0_i32_2 = arith.constant 0 : i32
    return %c0_i32, %c0_i32_0, %c0_i32_1 : i32, i32, i32
  }
  func.func @transform_2(%arg0: i32) -> (i32, i32, i32) {
    %c0_i32 = arith.constant 0 : i32
    %c0_i32_0 = arith.constant 0 : i32
    %c0_i32_1 = arith.constant 0 : i32
    return %c0_i32, %arg0, %c0_i32_0 : i32, i32, i32
  }
}

</mosaic_0001>

<llo_original>
// kernel: tpu_custom_call.1
$region0: #{tpu_custom_call.1}
  #allocation0 [shape = 'u32[]', space=smem, size = 0x4, offset = 0x4, fixed_abs, tag = 'smem constant byte address 0x4 - core index']
  #allocation1 [shape = 'u32[144,128]{1,0:T(1,128)}', space=vmem, size = 0x12000, scoped, tag = 'internal scratch']
  #allocation8 [shape = 's32[]', space=sflag, size = 0x4, offset = 0, fixed_abs, tag = 'sflag constant byte address 0x0 - dummy sync flag']
  %s0 = inlined_call_operand.hbm [shape: f32[1,128,128], index: 0, kind: input, shape index: {}]
  %s1 = inlined_call_operand.hbm [shape: f32[1,128,128], index: 1, kind: input, shape index: {}]
  %s2 = inlined_call_operand.hbm [shape: f32[3,128,128], index: 2, kind: output, shape index: {}]
  %s3 = sld [smem:[#allocation0]]
  $region49: #{tpu_custom_call.1} parent=0
    _
  %s5 = ssub.s32 1, %s3
  %s6 = scalar_select 0, %s5, %s3
  $region1: #{tpu_custom_call.1} parent=0
    #allocation2 [shape = 'u8[65536]{0}', space=vmem, size = 0x10000, scoped, tag = 'input window, operand 0']
    #allocation3 [shape = 's32[2]{0}', space=sflag, size = 0x8, scoped, tag = 'scoped memory for tpu_custom_call.1']
    #allocation4 [shape = 's32[2]{0}', space=sflag, size = 0x8, scoped, tag = 'scoped memory for tpu_custom_call.1']
    #allocation5 [shape = 'u8[65536]{0}', space=vmem, size = 0x10000, scoped, tag = 'input window, operand 1, single buffered']
    #allocation6 [shape = 's32[1]{0}', space=sflag, size = 0x4, scoped, tag = 'scoped memory for tpu_custom_call.1']
    #allocation7 [shape = 'u8[196608]{0}', space=vmem, size = 0x30000, scoped, tag = 'output window, operand 0']
    %7 = vsyncpa [#allocation3], 0
    %s8 = scalar_lea.sflag [#allocation3], 1
    %9 = vsyncpa %s8, 0
    %10 = vsyncpa [#allocation6], 0
    %11 = vsyncpa [#allocation4], 0
    %s12 = scalar_lea.sflag [#allocation4], 1
    %13 = vsyncpa %s12, 0
    loop: start=0, step=1, limit=4
    $region2: #{tpu_custom_call.1} parent=1 // loop_pre_header
      _
    $region3: #{tpu_custom_call.1} parent=1 // loop_header
      %s15 = sphi 0, %s19
      %p16 = scmp.ge.s32.totalorder %s15, 4
      %s25 = sphi 0, %s27
      %s28 = sphi 0, %s25
      %s29 = sphi 0, %s28
      %s45 = sphi 0, %s29
      %s49 = sphi 0, %s49
      %s51 = sphi 0, %s49
      %s52 = sphi 0, %s51
      %s66 = sphi 0, %s52
      %s72 = sphi 0, %s74
      %s75 = sphi 0, %s72
      %s76 = sphi 0, %s75
      %s92 = sphi 0, %s76
    $region4: #{tpu_custom_call.1} parent=1 // loop_header_branch
      %18 = sbr.rel (%p16) target = $region8
    $region5: #{tpu_custom_call.1} parent=1 // loop_body
      %s20 = ssub.s32 %s15, 1
      %s21 = ssub.s32 %s15, 2
      %s22 = sadd.s32 %s15, 1
      %s23 = ssub.s32 %s15, %s22
      %p24 = scmp.eq.s32.totalorder %s23, 0
      %s26 = sadd.s32 %s25, 1
      %s27 = scalar_select %p24, %s25, %s26
      %p30 = pneg %p24
      %p31 = scmp.eq.s32.totalorder %s15, 1
      %p32 = por %p30, %p31
      %p33 = scmp.ne.s32.totalorder %s25, %s28
      %p34 = scmp.eq.s32.totalorder %s15, 0
      %p35 = por %p33, %p34
      %p36 = scmp.ne.s32.totalorder %s25, %s28
      %p37 = scmp.eq.s32.totalorder %s20, 1
      %p38 = por %p36, %p37
      %p39 = scmp.ne.s32.totalorder %s28, %s29
      %p40 = scmp.eq.s32.totalorder %s20, 0
      %p41 = por %p39, %p40
      %p42 = scmp.ne.s32.totalorder %s28, %s29
      %p43 = scmp.eq.s32.totalorder %s21, 1
      %p44 = por %p42, %p43
      %p46 = scmp.ne.s32.totalorder %s29, %s45
      %p47 = scmp.eq.s32.totalorder %s21, 0
      %p48 = por %p46, %p47
      %s50 = sadd.s32 %s49, 1
      %p53 = scmp.eq.s32.totalorder %s15, 1
      %p54 = scmp.ne.s32.totalorder %s49, %s51
      %p55 = scmp.eq.s32.totalorder %s15, 0
      %p56 = por %p54, %p55
      %p57 = scmp.ne.s32.totalorder %s49, %s51
      %p58 = scmp.eq.s32.totalorder %s20, 1
      %p59 = por %p57, %p58
      %p60 = scmp.ne.s32.totalorder %s51, %s52
      %p61 = scmp.eq.s32.totalorder %s20, 0
      %p62 = por %p60, %p61
      %p63 = scmp.ne.s32.totalorder %s51, %s52
      %p64 = scmp.eq.s32.totalorder %s21, 1
      %p65 = por %p63, %p64
      %p67 = scmp.ne.s32.totalorder %s52, %s66
      %p68 = scmp.eq.s32.totalorder %s21, 0
      %p69 = por %p67, %p68
      %s70 = ssub.s32 %s15, %s22
      %p71 = scmp.eq.s32.totalorder %s70, 0
      %s73 = sadd.s32 %s72, 1
      %s74 = scalar_select %p71, %s72, %s73
      %p77 = pneg %p71
      %p78 = scmp.eq.s32.totalorder %s15, 1
      %p79 = por %p77, %p78
      %p80 = scmp.ne.s32.totalorder %s72, %s75
      %p81 = scmp.eq.s32.totalorder %s15, 0
      %p82 = por %p80, %p81
      %p83 = scmp.ne.s32.totalorder %s72, %s75
      %p84 = scmp.eq.s32.totalorder %s20, 1
      %p85 = por %p83, %p84
      %p86 = scmp.ne.s32.totalorder %s75, %s76
      %p87 = scmp.eq.s32.totalorder %s20, 0
      %p88 = por %p86, %p87
      %p89 = scmp.ne.s32.totalorder %s75, %s76
      %p90 = scmp.eq.s32.totalorder %s21, 1
      %p91 = por %p89, %p90
      %p93 = scmp.ne.s32.totalorder %s76, %s92
      %p94 = scmp.eq.s32.totalorder %s21, 0
      %p95 = por %p93, %p94
      %p96 = scmp.le.s32.totalorder 1, %s15
      %p97 = scmp.lt.s32.totalorder %s15, 3
      %p98 = pnand %p96, %p97
      %p99 = pneg %p98
      // Predicated region
      $region9: #{tpu_custom_call.1} parent=5 // pred_check
        _
      $region10: #{tpu_custom_call.1} parent=5 // pred_check_branch
        %101 = sbr.rel (%p98) target = $region12
      $region11: #{tpu_custom_call.1} parent=5 // pred_region
        %s102 = ssub.s32 %s15, 1
        // Predicated region
        $region13: #{tpu_custom_call.1} parent=11 // pred_check
          %p103 = pneg %p62
        $region14: #{tpu_custom_call.1} parent=11 // pred_check_branch
          %105 = sbr.rel (%p103) target = $region16
        $region15: #{tpu_custom_call.1} parent=11 // pred_region
          %s107 = ssub.s32 2048, 2048
          %108 = vsyncadd [#allocation6], %s107
          %s109 = sshll.u32 [#allocation5], 4
          %s110 = int_to_ptr.vmem [resolvable:$true] %s109
          %115 = dma.hbm_to_vmem [thread:$0]  %s1, 2048, %s110, [#allocation6], 128, 128, 8
        $region16: #{tpu_custom_call.1} parent=11 // pred_fallthru
          _
      $region12: #{tpu_custom_call.1} parent=5 // pred_fallthru
        _
      %p116 = scmp.lt.s32.totalorder %s15, 2
      // Predicated region
      $region17: #{tpu_custom_call.1} parent=5 // pred_check
        %p117 = pneg %p116
      $region18: #{tpu_custom_call.1} parent=5 // pred_check_branch
        %119 = sbr.rel (%p117) target = $region20
      $region19: #{tpu_custom_call.1} parent=5 // pred_region
        // Predicated region
        $region21: #{tpu_custom_call.1} parent=19 // pred_check
          %p120 = pneg %p35
        $region22: #{tpu_custom_call.1} parent=19 // pred_check_branch
          %122 = sbr.rel (%p120) target = $region24
        $region23: #{tpu_custom_call.1} parent=19 // pred_region
          %s123 = sand.u32 %s25, 1
          %s124 = scalar_lea.sflag [#allocation3], %s123
          %s125 = sand.u32 %s25, 1
          %s126 = smul.addr %s125, 64
          %s127 = scalar_lea.vmem [#allocation2], %s126
          %s128 = smul.u32 8, %s15
          %s130 = ssub.s32 1024, 1024
          %131 = vsyncadd %s124, %s130
          %s132 = smul.addr %s128, 128
          %s133 = scalar_lea.hbm %s0, %s132
          %s134 = sshll.u32 %s127, 4
          %s135 = int_to_ptr.vmem [resolvable:$true] %s134
          %140 = dma.hbm_to_vmem [thread:$0]  %s133, 1024, %s135, %s124, 128, 128, 8
        $region24: #{tpu_custom_call.1} parent=19 // pred_fallthru
          _
      $region20: #{tpu_custom_call.1} parent=5 // pred_fallthru
        _
      %p141 = scmp.le.s32.totalorder 1, %s15
      %p142 = scmp.lt.s32.totalorder %s15, 3
      %p143 = pnand %p141, %p142
      %p144 = pneg %p143
      // Predicated region
      $region25: #{tpu_custom_call.1} parent=5 // pred_check
        _
      $region26: #{tpu_custom_call.1} parent=5 // pred_check_branch
        %146 = sbr.rel (%p143) target = $region28
      $region27: #{tpu_custom_call.1} parent=5 // pred_region
        %s147 = ssub.s32 %s15, 1
        %s148 = sand.u32 %s28, 1
        %s149 = scalar_lea.sflag [#allocation3], %s148
        %s150 = sand.u32 %s28, 1
        %s151 = smul.addr %s150, 64
        %s152 = scalar_lea.vmem [#allocation2], %s151
        // Predicated region
        $region29: #{tpu_custom_call.1} parent=27 // pred_check
          %p153 = pneg %p41
        $region30: #{tpu_custom_call.1} parent=27 // pred_check_branch
          %155 = sbr.rel (%p153) target = $region32
        $region31: #{tpu_custom_call.1} parent=27 // pred_region
          %156 = dma.done %s149, 1024
        $region32: #{tpu_custom_call.1} parent=27 // pred_fallthru
          _
        // Predicated region
        $region33: #{tpu_custom_call.1} parent=27 // pred_check
          %p157 = pneg %p62
        $region34: #{tpu_custom_call.1} parent=27 // pred_check_branch
          %159 = sbr.rel (%p157) target = $region36
        $region35: #{tpu_custom_call.1} parent=27 // pred_region
          %160 = dma.done [#allocation6], 2048
        $region36: #{tpu_custom_call.1} parent=27 // pred_fallthru
          _
        %s161 = sand.u32 %s28, 1
        %s162 = scalar_lea.sflag [#allocation3], %s161
        %s163 = sand.u32 %s28, 1
        %s164 = smul.addr %s163, 64
        %s165 = scalar_lea.vmem [#allocation2], %s164
        %p166 = pneg %p41
        %p167 = pneg %p38
        %p168 = pneg %p62
        %p169 = pneg %p59
        %p170 = pneg %p88
        %p171 = pneg %p85
        %s172 = sand.u32 %s75, 1
        %s173 = scalar_lea.sflag [#allocation4], %s172
        %s174 = sand.u32 %s75, 1
        %s175 = smul.addr %s174, 192
        %s176 = scalar_lea.vmem [#allocation7], %s175
        %s177 = smul.u32 8, %s20
        %s178 = smul.u32 8, %s20
        %v179 = vld [vmem:[%s152] sm:$0xff]
        %v180 = vld [vmem:[%s152 + $0x8] sm:$0xff]
        %v181 = vld [vmem:[%s152 + $0x10] sm:$0xff]
        %v182 = vld [vmem:[%s152 + $0x18] sm:$0xff]
        %v183 = vld [vmem:[%s152 + $0x20] sm:$0xff]
        %v184 = vld [vmem:[%s152 + $0x28] sm:$0xff]
        %v185 = vld [vmem:[%s152 + $0x30] sm:$0xff]
        %v186 = vld [vmem:[%s152 + $0x38] sm:$0xff]
        %v187 = vld [vmem:[#allocation5] sm:$0xff]
        %v188 = vld [vmem:[#allocation5 + $0x8] sm:$0xff]
        %v189 = vld [vmem:[#allocation5 + $0x10] sm:$0xff]
        %v190 = vld [vmem:[#allocation5 + $0x18] sm:$0xff]
        %v191 = vld [vmem:[#allocation5 + $0x20] sm:$0xff]
        %v192 = vld [vmem:[#allocation5 + $0x28] sm:$0xff]
        %v193 = vld [vmem:[#allocation5 + $0x30] sm:$0xff]
        %v194 = vld [vmem:[#allocation5 + $0x38] sm:$0xff]
        %v195 = vld [vmem:[#allocation5 + $0x40] sm:$0xff]
        %v196 = vld [vmem:[#allocation5 + $0x48] sm:$0xff]
        %v197 = vld [vmem:[#allocation5 + $0x50] sm:$0xff]
        %v198 = vld [vmem:[#allocation5 + $0x58] sm:$0xff]
        %v199 = vld [vmem:[#allocation5 + $0x60] sm:$0xff]
        %v200 = vld [vmem:[#allocation5 + $0x68] sm:$0xff]
        %v201 = vld [vmem:[#allocation5 + $0x70] sm:$0xff]
        %v202 = vld [vmem:[#allocation5 + $0x78] sm:$0xff]
        %203 = vmatprep.subr.mxu0 0.0
        %204 = vmatpush1.msra.mxu0 %v187
        %205 = vmatprep.subr.mxu0 0.0
        %206 = vmatpush1.msra.mxu0 %v188
        %207 = vmatprep.subr.mxu0 0.0
        %208 = vmatpush1.msra.mxu0 %v189
        %209 = vmatprep.subr.mxu0 0.0
        %210 = vmatpush1.msra.mxu0 %v190
        %211 = vmatprep.subr.mxu0 0.0
        %212 = vmatpush1.msra.mxu0 %v191
        %213 = vmatprep.subr.mxu0 0.0
        %214 = vmatpush1.msra.mxu0 %v192
        %215 = vmatprep.subr.mxu0 0.0
        %216 = vmatpush1.msra.mxu0 %v193
        %217 = vmatprep.subr.mxu0 0.0
        %218 = vmatpush1.msra.mxu0 %v194
        %219 = vmatprep.subr.mxu0 0.0
        %220 = vmatpush1.msra.mxu0 %v195
        %221 = vmatprep.subr.mxu0 0.0
        %222 = vmatpush1.msra.mxu0 %v196
        %223 = vmatprep.subr.mxu0 0.0
        %224 = vmatpush1.msra.mxu0 %v197
        %225 = vmatprep.subr.mxu0 0.0
        %226 = vmatpush1.msra.mxu0 %v198
        %227 = vmatprep.subr.mxu0 0.0
        %228 = vmatpush1.msra.mxu0 %v199
        %229 = vmatprep.subr.mxu0 0.0
        %230 = vmatpush1.msra.mxu0 %v200
        %231 = vmatprep.subr.mxu0 0.0
        %232 = vmatpush1.msra.mxu0 %v201
        %233 = vmatprep.subr.mxu0 0.0
        %234 = vmatpush1.msra.mxu0 %v202
        %235 = vmatprep.subr.mxu0 0.0
        %236 = vmatpush1.msra.mxu0 0.0
        %237 = vmatprep.subr.mxu0 0.0
        %238 = vmatpush1.msra.mxu0 0.0
        %239 = vmatprep.subr.mxu0 0.0
        %240 = vmatpush1.msra.mxu0 0.0
        %241 = vmatprep.subr.mxu0 0.0
        %242 = vmatpush1.msra.mxu0 0.0
        %243 = vmatprep.subr.mxu0 0.0
        %244 = vmatpush1.msra.mxu0 0.0
        %245 = vmatprep.subr.mxu0 0.0
        %246 = vmatpush1.msra.mxu0 0.0
        %247 = vmatprep.subr.mxu0 0.0
        %248 = vmatpush1.msra.mxu0 0.0
        %249 = vmatprep.subr.mxu0 0.0
        %250 = vmatpush1.msra.mxu0 0.0
        %251 = vmatprep.subr.mxu0 0.0
        %252 = vmatpush1.msra.mxu0 0.0
        %253 = vmatprep.subr.mxu0 0.0
        %254 = vmatpush1.msra.mxu0 0.0
        %255 = vmatprep.subr.mxu0 0.0
        %256 = vmatpush1.msra.mxu0 0.0
        %257 = vmatprep.subr.mxu0 0.0
        %258 = vmatpush1.msra.mxu0 0.0
        %259 = vmatprep.subr.mxu0 0.0
        %260 = vmatpush1.msra.mxu0 0.0
        %261 = vmatprep.subr.mxu0 0.0
        %262 = vmatpush1.msra.mxu0 0.0
        %263 = vmatprep.subr.mxu0 0.0
        %264 = vmatpush1.msra.mxu0 0.0
        %265 = vmatprep.subr.mxu0 0.0
        %266 = vmatpush1.msra.mxu0 0.0
        %267 = vmatprep.mubr.f32.mxu0 0.0
        %268 = vmatmul.mubr.f32.gmra.mrb[0].mxu0 %v179
        %v269 = vpop.f32.mrb[0].mxu0
        %v270 = vadd.f32 0.0, %v269
        %v271 = vpop.f32.mrb[0].mxu0
        %272 = vmatprep.mubr.f32.mxu0 0.0
        %273 = vmatmul.mubr.f32.gmra.mrb[0].mxu0 %v180
        %v274 = vpop.f32.mrb[0].mxu0
        %v275 = vadd.f32 0.0, %v274
        %v276 = vpop.f32.mrb[0].mxu0
        %277 = vmatprep.mubr.f32.mxu0 0.0
        %278 = vmatmul.mubr.f32.gmra.mrb[0].mxu0 %v181
        %v279 = vpop.f32.mrb[0].mxu0
        %v280 = vadd.f32 0.0, %v279
        %v281 = vpop.f32.mrb[0].mxu0
        %282 = vmatprep.mubr.f32.mxu0 0.0
        %283 = vmatmul.mubr.f32.gmra.mrb[0].mxu0 %v182
        %v284 = vpop.f32.mrb[0].mxu0
        %v285 = vadd.f32 0.0, %v284
        %v286 = vpop.f32.mrb[0].mxu0
        %287 = vmatprep.mubr.f32.mxu0 0.0
        %288 = vmatmul.mubr.f32.gmra.mrb[0].mxu0 %v183
        %v289 = vpop.f32.mrb[0].mxu0
        %v290 = vadd.f32 0.0, %v289
        %v291 = vpop.f32.mrb[0].mxu0
        %292 = vmatprep.mubr.f32.mxu0 0.0
        %293 = vmatmul.mubr.f32.gmra.mrb[0].mxu0 %v184
        %v294 = vpop.f32.mrb[0].mxu0
        %v295 = vadd.f32 0.0, %v294
        %v296 = vpop.f32.mrb[0].mxu0
        %297 = vmatprep.mubr.f32.mxu0 0.0
        %298 = vmatmul.mubr.f32.gmra.mrb[0].mxu0 %v185
        %v299 = vpop.f32.mrb[0].mxu0
        %v300 = vadd.f32 0.0, %v299
        %v301 = vpop.f32.mrb[0].mxu0
        %302 = vmatprep.mubr.f32.mxu0 0.0
        %303 = vmatmul.mubr.f32.gmra.mrb[0].mxu0 %v186
        %v304 = vpop.f32.mrb[0].mxu0
        %v305 = vadd.f32 0.0, %v304
        %v306 = vpop.f32.mrb[0].mxu0
        %307 = vdwg.mxu0
        %v308 = vmax.f32 %v270, 0.0
        %v309 = vmax.f32 %v275, 0.0
        %v310 = vmax.f32 %v280, 0.0
        %v311 = vmax.f32 %v285, 0.0
        %v312 = vmax.f32 %v290, 0.0
        %v313 = vmax.f32 %v295, 0.0
        %v314 = vmax.f32 %v300, 0.0
        %v315 = vmax.f32 %v305, 0.0
        %316 = vst [vmem:[%s176] sm:$0xff] %v308
        %317 = vst [vmem:[%s176 + $0x8] sm:$0xff] %v309
        %318 = vst [vmem:[%s176 + $0x10] sm:$0xff] %v310
        %319 = vst [vmem:[%s176 + $0x18] sm:$0xff] %v311
        %320 = vst [vmem:[%s176 + $0x20] sm:$0xff] %v312
        %321 = vst [vmem:[%s176 + $0x28] sm:$0xff] %v313
        %322 = vst [vmem:[%s176 + $0x30] sm:$0xff] %v314
        %323 = vst [vmem:[%s176 + $0x38] sm:$0xff] %v315
        %s324 = scalar_lea.vmem %s176, 64 [#allocation7]
        %325 = vst [vmem:[%s324] sm:$0xff] %v308
        %326 = vst [vmem:[%s324 + $0x8] sm:$0xff] %v309
        %327 = vst [vmem:[%s324 + $0x10] sm:$0xff] %v310
        %328 = vst [vmem:[%s324 + $0x18] sm:$0xff] %v311
        %329 = vst [vmem:[%s324 + $0x20] sm:$0xff] %v312
        %330 = vst [vmem:[%s324 + $0x28] sm:$0xff] %v313
        %331 = vst [vmem:[%s324 + $0x30] sm:$0xff] %v314
        %332 = vst [vmem:[%s324 + $0x38] sm:$0xff] %v315
        %s333 = scalar_lea.vmem %s176, 128 [#allocation7]
        %334 = vst [vmem:[%s333] sm:$0xff] %v308
        %335 = vst [vmem:[%s333 + $0x8] sm:$0xff] %v309
        %336 = vst [vmem:[%s333 + $0x10] sm:$0xff] %v310
        %337 = vst [vmem:[%s333 + $0x18] sm:$0xff] %v311
        %338 = vst [vmem:[%s333 + $0x20] sm:$0xff] %v312
        %339 = vst [vmem:[%s333 + $0x28] sm:$0xff] %v313
        %340 = vst [vmem:[%s333 + $0x30] sm:$0xff] %v314
        %341 = vst [vmem:[%s333 + $0x38] sm:$0xff] %v315
        %s342 = sand.u32 %s75, 1
        %s343 = scalar_lea.sflag [#allocation4], %s342
        %s344 = sand.u32 %s75, 1
        %s345 = smul.addr %s344, 192
        %s346 = scalar_lea.vmem [#allocation7], %s345
        // Predicated region
        $region37: #{tpu_custom_call.1} parent=27 // pred_check
          %p347 = pneg %p85
        $region38: #{tpu_custom_call.1} parent=27 // pred_check_branch
          %349 = sbr.rel (%p347) target = $region40
        $region39: #{tpu_custom_call.1} parent=27 // pred_region
          #allocation9 [shape = 'u32[6]{0}', space=smem, size = 0x18, scoped, tag = 'DMA stride descriptor']
          %s350 = smul.u32 8, %s20
          %s352 = ssub.s32 3072, 3072
          %353 = vsyncadd %s343, %s352
          %s354 = smul.addr %s350, 128
          %s355 = scalar_lea.hbm %s2, %s354
          %s357 = sshll.u32 1, 14
          %s358 = sxor.u32 4294967295, %s357
          %s361 = sshll.u32 7, 18
          %s362 = sxor.u32 4294967295, %s361
          %s363 = sand.u32 0, %s362
          %s365 = sor.u32 %s363, 0
          %s367 = sshll.u32 3, 24
          %s368 = sxor.u32 4294967295, %s367
          %s369 = sand.u32 %s365, %s368
          %s371 = sor.u32 %s369, 0
          %s372 = sshll.u32 %s346, 4
          %s373 = int_to_ptr.vmem [resolvable:$true] %s372
          %379 = sst [smem:[#allocation9]] 1024
          %s380 = scalar_lea.smem [#allocation9], 1
          %381 = sst [smem:[%s380]] 2048
          %s382 = scalar_lea.smem [#allocation9], 2
          %383 = sst [smem:[%s382]] 8
          %s384 = scalar_lea.smem [#allocation9], 3
          %385 = sst [smem:[%s384]] 128
          %s386 = scalar_lea.smem [#allocation9], 4
          %387 = sst [smem:[%s386]] 128
          %s388 = scalar_lea.smem [#allocation9], 5
          %389 = sst [smem:[%s388]] 8
          %391 = dma.general %s373, 3072, %s355, %s343, [#allocation8], [#allocation9], %s371, 0
        $region40: #{tpu_custom_call.1} parent=27 // pred_fallthru
          _
      $region28: #{tpu_custom_call.1} parent=5 // pred_fallthru
        _
      %p392 = scmp.le.s32.totalorder 2, %s15
      // Predicated region
      $region41: #{tpu_custom_call.1} parent=5 // pred_check
        %p393 = pneg %p392
      $region42: #{tpu_custom_call.1} parent=5 // pred_check_branch
        %395 = sbr.rel (%p393) target = $region44
      $region43: #{tpu_custom_call.1} parent=5 // pred_region
        %s396 = ssub.s32 %s15, 2
        // Predicated region
        $region45: #{tpu_custom_call.1} parent=43 // pred_check
          %p397 = pneg %p91
        $region46: #{tpu_custom_call.1} parent=43 // pred_check_branch
          %399 = sbr.rel (%p397) target = $region48
        $region47: #{tpu_custom_call.1} parent=43 // pred_region
          %s400 = sand.u32 %s76, 1
          %s401 = scalar_lea.sflag [#allocation4], %s400
          %s402 = sand.u32 %s76, 1
          %s403 = smul.addr %s402, 192
          %s404 = scalar_lea.vmem [#allocation7], %s403
          %405 = dma.done %s401, 3072
        $region48: #{tpu_custom_call.1} parent=43 // pred_fallthru
          _
      $region44: #{tpu_custom_call.1} parent=5 // pred_fallthru
        _
    $region6: #{tpu_custom_call.1} parent=1 // loop_footer
      %s19 = sadd.s32 1, %s15
    $region7: #{tpu_custom_call.1} parent=1 // loop_footer_branch
      %14 = sbr.rel target = $region3
    $region8: #{tpu_custom_call.1} parent=1 // loop_exit
      _
    %406 = vsyncpa [#allocation3], 1
    %s407 = scalar_lea.sflag [#allocation3], 1
    %408 = vsyncpa %s407, 1
    %409 = vsyncpa [#allocation6], 1
    %410 = vsyncpa [#allocation4], 1
    %s411 = scalar_lea.sflag [#allocation4], 1
    %412 = vsyncpa %s411, 1

</llo_original>
